<compile_context>
chip_gen: v5e
topology: v5e:2x2
jax: 0.10.0
libtpu: 0.0.40
codegen_flags: <defaults>
</compile_context>

<pallas_src>
import functools

import jax
import jax.numpy as jnp
from jax import lax
from jax.experimental import pallas as pl
from jax.experimental.pallas import tpu as pltpu

_LANE = 128


def _attn_general_kernel(h_ref, w_ref, enc_t_ref, out_ref, *, s_valid, s_pad):
    h = h_ref[...]          # (TB, H)     decode-step hidden states
    w = w_ref[...]          # (H, H)      nn.Linear weight, [out_features, in_features]
    enc_t = enc_t_ref[...]  # (H, S_pad)  encoder outputs, pre-transposed + lane-padded

    # hw[b, a] = sum_k h[b, k] * W[k, a]   (== h^T W; contract h axis 1 with W axis 0)
    hw = lax.dot_general(h, w, (((1,), (0,)), ((), ())),
                         preferred_element_type=jnp.float32)

    # e[b, s] = sum_a hw[b, a] * enc_t[a, s]   (plain [M,K]x[K,N]; no transpose needed)
    e = lax.dot_general(hw, enc_t, (((1,), (0,)), ((), ())),
                        preferred_element_type=jnp.float32)

    if s_valid != s_pad:
        # Padded sequence columns must not participate in the softmax.
        col = lax.broadcasted_iota(jnp.int32, e.shape, 1)
        e = jnp.where(col < s_valid, e, -jnp.inf)

    # Row-wise numerically-stable softmax over the (padded) sequence axis.
    m = jnp.max(e, axis=-1, keepdims=True)
    p = jnp.exp(e - m)
    denom = jnp.sum(p, axis=-1, keepdims=True)
    # approx=False: EUP approximate reciprocal would likely violate 1e-5 allclose.
    out_ref[...] = p * pl.reciprocal(denom, approx=False)


def attn_general_batched(hidden, encoder_outputs, weight, *, block_b=None):
    """
    Batched 'general' attention over B decode steps sharing one encoder.

    hidden:           (B, H) float32
    encoder_outputs:  (S, H) float32
    weight:           (H, H) float32  (PyTorch Linear weight, [out, in])
    returns:          (B, S) float32  softmax-normalized attention energies

    The nn.Linear bias is intentionally omitted: it shifts every energy of a
    row by the constant hidden.bias, which cancels in softmax.
    """
    B, H = hidden.shape
    S, He = encoder_outputs.shape
    assert He == H and weight.shape == (H, H)

    # Lane-dense output: pad the sequence axis up to a multiple of 128.
    S_pad = max(_LANE, ((S + _LANE - 1) // _LANE) * _LANE)

    if block_b is None:
        # Prefer a single grid step (per-step overhead ~0.35 us dwarfs the
        # compute at small sizes); only tile very large batches.
        block_b = B
        if B > 1024:
            for cand in (1024, 512, 256, 128, 64, 32, 16, 8):
                if B % cand == 0:
                    block_b = cand
                    break
    assert B % block_b == 0, "B must be a multiple of block_b"
    assert block_b == B or block_b % 8 == 0, (
        "block_b must be a multiple of 8 (f32 sublane granularity) or equal B")
    nb = B // block_b

    # Pre-transpose (and lane-pad) the encoder ONCE outside the kernel so the
    # second matmul feeds the MXU natively with S on lanes.
    enc_t = jnp.pad(encoder_outputs.astype(jnp.float32).T,
                    ((0, 0), (0, S_pad - S)))

    kernel = functools.partial(_attn_general_kernel, s_valid=S, s_pad=S_pad)

    cost = pl.CostEstimate(
        flops=2 * B * H * H + 2 * B * S_pad * H,
        transcendentals=B * S_pad,
        bytes_accessed=4 * (B * H + H * S_pad + H * H + B * S_pad),
    )

    # Only shard across TensorCores when the grid actually has work to split.
    cp_kwargs = dict(
        dimension_semantics=("parallel",) if nb > 1 else ("arbitrary",))
    # Rough double-buffered VMEM footprint; raise the scoped limit only when
    # needed, capped at 64 MiB so it stays valid on v7x.
    est_vmem = 4 * (2 * block_b * H + 2 * H * S_pad + 2 * H * H
                    + 2 * block_b * S_pad)
    if est_vmem > (12 << 20):
        cp_kwargs["vmem_limit_bytes"] = min(2 * est_vmem, 64 << 20)

    out = pl.pallas_call(
        kernel,
        out_shape=jax.ShapeDtypeStruct((B, S_pad), jnp.float32),
        grid=(nb,),
        in_specs=[
            pl.BlockSpec((block_b, H), lambda b: (b, 0)),     # hidden: tiled over batch
            pl.BlockSpec((H, H), lambda b: (0, 0)),           # weight: resident
            pl.BlockSpec((H, S_pad), lambda b: (0, 0)),       # enc^T: resident
        ],
        out_specs=pl.BlockSpec((block_b, S_pad), lambda b: (b, 0)),
        compiler_params=pltpu.CompilerParams(**cp_kwargs),
        cost_estimate=cost,
    )(hidden.astype(jnp.float32), weight.astype(jnp.float32), enc_t)

    return out[:, :S]


def attn_general(hidden, encoder_outputs, weight, bias=None):
    """
    Module-faithful entry point (single decode step, as in Attn.forward).

    hidden:           (1, 1, H) float32
    encoder_outputs:  (S, 1, H) float32
    weight:           (H, H)    float32  (PyTorch Linear weight, [out, in])
    bias:             (H,)      float32  accepted for API parity; unused
                                         (uniform energy shift -> softmax-invariant)
    returns:          (1, 1, S) float32  softmax-normalized attention energies

    NOTE: a single decode step is a few hundred FLOPs and is entirely
    launch/DMA-overhead bound; production callers should batch decode steps
    through attn_general_batched (or use plain XLA for one-off steps).
    """
    del bias  # softmax-invariant constant offset
    H = hidden.shape[-1]
    S = encoder_outputs.shape[0]
    h2 = hidden.reshape(1, H)
    # Pad the single step to 8 rows (f32 sublane granularity); row 0 is real.
    h8 = jnp.pad(h2, ((0, 7), (0, 0)))
    enc2 = encoder_outputs.reshape(S, H)
    out = attn_general_batched(h8, enc2, weight, block_b=8)
    return out[0:1, :].reshape(1, 1, S)


def _reference(hidden, encoder_outputs, weight, bias):
    """Pure-JAX reference matching the PyTorch module (bias included)."""
    H = hidden.shape[-1]
    S = encoder_outputs.shape[0]
    h = hidden.reshape(H)
    enc = encoder_outputs.reshape(S, H)
    proj = enc @ weight.T + bias            # (S, H)
    e = proj @ h                            # (S,)
    e = e - jnp.max(e)
    p = jnp.exp(e)
    return (p / jnp.sum(p)).reshape(1, 1, S)


def _reference_batched(hidden_b, enc, weight, bias):
    e = hidden_b @ weight @ enc.T + (hidden_b @ bias)[:, None]   # (B, S)
    return jax.nn.softmax(e, axis=-1)


if __name__ == "__main__":
    key = jax.random.PRNGKey(0)
    k_h, k_e, k_w, k_b = jax.random.split(key, 4)

    H = 32   # decoder_hidden_size
    S = 8    # seq_len

    hidden = jax.random.normal(k_h, (1, 1, H), dtype=jnp.float32)
    encoder_outputs = jax.random.normal(k_e, (S, 1, H), dtype=jnp.float32)
    # Deterministic "nn.Linear(H, H)" parameters (synthetic, not a checkpoint).
    weight = jax.random.normal(k_w, (H, H), dtype=jnp.float32) * (1.0 / jnp.sqrt(H))
    bias = jax.random.normal(k_b, (H,), dtype=jnp.float32) * 0.1

    # --- Module-faithful single-step path (matches Attn.forward exactly) ---
    out = attn_general(hidden, encoder_outputs, weight, bias)
    jax.block_until_ready(out)
    ref = _reference(hidden, encoder_outputs, weight, bias)
    assert out.shape == (1, 1, S)
    assert jnp.allclose(out, ref, atol=1e-5, rtol=1e-5)

    # --- Batched path: many decode steps, single grid step (block_b = B) ---
    B = 16
    hidden_b = jax.random.normal(jax.random.fold_in(key, 1), (B, H), dtype=jnp.float32)
    enc2 = encoder_outputs.reshape(S, H)
    out_b = attn_general_batched(hidden_b, enc2, weight)
    jax.block_until_ready(out_b)
    ref_b = _reference_batched(hidden_b, enc2, weight, bias)
    assert out_b.shape == (B, S)
    assert jnp.allclose(out_b, ref_b, atol=1e-5, rtol=1e-5)

    # TODO(synk): 'dot' and 'concat' attention variants not implemented; 'general' only.
    print("KERNEL_OK")
</pallas_src>

<mosaic_0001>
module attributes {stable_mosaic.version = 11 : i64} {
  func.func @_attn_general_kernel(%arg0: i32, %arg1: memref<8x32xf32, #tpu.memory_space<vmem>>, %arg2: memref<32x32xf32, #tpu.memory_space<vmem>>, %arg3: memref<32x128xf32, #tpu.memory_space<vmem>>, %arg4: memref<8x128xf32, #tpu.memory_space<vmem>>) attributes {dimension_semantics = [#tpu.dimension_semantics<arbitrary>], iteration_bounds = array<i64: 1>, scalar_prefetch = 0 : i64, scratch_operands = 0 : i64, tpu.core_type = #tpu.core_type<tc>, window_params = [{transform_indices = @transform_0, window_bounds = array<i64: 8, 32>}, {pipeline_mode = #tpu.pipeline_mode<synchronous>, transform_indices = @transform_1, window_bounds = array<i64: 32, 32>}, {pipeline_mode = #tpu.pipeline_mode<synchronous>, transform_indices = @transform_2, window_bounds = array<i64: 32, 128>}, {transform_indices = @transform_3, window_bounds = array<i64: 8, 128>}]} {
    %c0 = arith.constant 0 : index
    %c0_0 = arith.constant 0 : index
    %0 = vector.load %arg1[%c0, %c0_0] : memref<8x32xf32, #tpu.memory_space<vmem>>, vector<8x32xf32>
    %c0_1 = arith.constant 0 : index
    %c0_2 = arith.constant 0 : index
    %1 = vector.load %arg2[%c0_1, %c0_2] : memref<32x32xf32, #tpu.memory_space<vmem>>, vector<32x32xf32>
    %c0_3 = arith.constant 0 : index
    %c0_4 = arith.constant 0 : index
    %2 = vector.load %arg3[%c0_3, %c0_4] : memref<32x128xf32, #tpu.memory_space<vmem>>, vector<32x128xf32>
    %cst = arith.constant dense<0.000000e+00> : vector<8x32xf32>
    %3 = tpu.matmul %0, %1, %cst {dimension_numbers = #tpu.dot_dimension_numbers<[1], [0], [0], [1], [0, 0, 1, 1], [], []>} : vector<8x32xf32>, vector<32x32xf32>, vector<8x32xf32> -> vector<8x32xf32>
    %cst_5 = arith.constant dense<0.000000e+00> : vector<8x128xf32>
    %4 = tpu.matmul %3, %2, %cst_5 {dimension_numbers = #tpu.dot_dimension_numbers<[1], [0], [0], [1], [0, 0, 1, 1], [], []>} : vector<8x32xf32>, vector<32x128xf32>, vector<8x128xf32> -> vector<8x128xf32>
    %5 = tpu.iota {dimensions = array<i32: 1>} : vector<8x128xi32>
    %c8_i32 = arith.constant 8 : i32
    %6 = vector.broadcast %c8_i32 : i32 to vector<8x128xi32>
    %7 = arith.cmpi slt, %5, %6 : vector<8x128xi32>
    %cst_6 = arith.constant 0xFF800000 : f32
    %8 = vector.broadcast %cst_6 : f32 to vector<8x128xf32>
    %9 = arith.select %7, %4, %8 : vector<8x128xi1>, vector<8x128xf32>
    %cst_7 = arith.constant dense<0xFF800000> : vector<8xf32>
    %10 = vector.multi_reduction <maximumf>, %9, %cst_7 [1] : vector<8x128xf32> to vector<8xf32>
    %11 = vector.shape_cast %10 : vector<8xf32> to vector<8x1xf32>
    %12 = vector.broadcast %11 : vector<8x1xf32> to vector<8x128xf32>
    %13 = arith.subf %9, %12 : vector<8x128xf32>
    %14 = math.exp %13 : vector<8x128xf32>
    %cst_8 = arith.constant dense<0.000000e+00> : vector<8xf32>
    %15 = vector.multi_reduction <add>, %14, %cst_8 [1] : vector<8x128xf32> to vector<8xf32>
    %16 = vector.shape_cast %15 : vector<8xf32> to vector<8x1xf32>
    %17 = tpu.reciprocal %16 : vector<8x1xf32> -> vector<8x1xf32>
    %18 = vector.broadcast %17 : vector<8x1xf32> to vector<8x128xf32>
    %19 = arith.mulf %14, %18 : vector<8x128xf32>
    %c0_9 = arith.constant 0 : index
    %c0_10 = arith.constant 0 : index
    %20 = vector.load %arg4[%c0_9, %c0_10] : memref<8x128xf32, #tpu.memory_space<vmem>>, vector<8x128xf32>
    tpu.vector_store %arg4[%c0_9, %c0_10], %19 {strides = array<i32>} : memref<8x128xf32, #tpu.memory_space<vmem>>, vector<8x128xf32>,
    return
  }
  func.func @transform_0(%arg0: i32) -> (i32, i32) {
    %c0_i32 = arith.constant 0 : i32
    %c0_i32_0 = arith.constant 0 : i32
    return %arg0, %c0_i32 : i32, i32
  }
  func.func @transform_1(%arg0: i32) -> (i32, i32) {
    %c0_i32 = arith.constant 0 : i32
    %c0_i32_0 = arith.constant 0 : i32
    %c0_i32_1 = arith.constant 0 : i32
    return %c0_i32, %c0_i32_0 : i32, i32
  }
  func.func @transform_2(%arg0: i32) -> (i32, i32) {
    %c0_i32 = arith.constant 0 : i32
    %c0_i32_0 = arith.constant 0 : i32
    %c0_i32_1 = arith.constant 0 : i32
    return %c0_i32, %c0_i32_0 : i32, i32
  }
  func.func @transform_3(%arg0: i32) -> (i32, i32) {
    %c0_i32 = arith.constant 0 : i32
    %c0_i32_0 = arith.constant 0 : i32
    return %arg0, %c0_i32 : i32, i32
  }
}

</mosaic_0001>

<llo_original>
// kernel: tpu_custom_call.1
$region0: #{tpu_custom_call.1}
  #allocation0 [shape = 'u32[]', space=smem, size = 0x4, offset = 0x4, fixed_abs, tag = 'smem constant byte address 0x4 - core index']
  #allocation1 [shape = 'u32[72,128]{1,0:T(1,128)}', space=vmem, size = 0x9000, scoped, tag = 'internal scratch']
  %s0 = inlined_call_operand.hbm [shape: f32[8,32], index: 0, kind: input, shape index: {}]
  %s1 = inlined_call_operand.hbm [shape: f32[32,32], index: 1, kind: input, shape index: {}]
  %s2 = inlined_call_operand.hbm [shape: f32[32,128], index: 2, kind: input, shape index: {}]
  %s3 = inlined_call_operand.hbm [shape: f32[8,128], index: 3, kind: output, shape index: {}]
  %s4 = sld [smem:[#allocation0]]
  $region34: #{tpu_custom_call.1} parent=0
    _
  %s6 = ssub.s32 1, %s4
  %s7 = scalar_select 0, %s6, %s4
  $region1: #{tpu_custom_call.1} parent=0
    #allocation2 [shape = 'u8[4096]{0}', space=vmem, size = 0x1000, scoped, tag = 'input window, operand 0, single buffered']
    #allocation3 [shape = 's32[1]{0}', space=sflag, size = 0x4, scoped, tag = 'scoped memory for tpu_custom_call.1']
    #allocation4 [shape = 's32[1]{0}', space=sflag, size = 0x4, scoped, tag = 'scoped memory for tpu_custom_call.1']
    #allocation5 [shape = 'u8[16384]{0}', space=vmem, size = 0x4000, scoped, tag = 'input window, operand 1, single buffered']
    #allocation6 [shape = 's32[1]{0}', space=sflag, size = 0x4, scoped, tag = 'scoped memory for tpu_custom_call.1']
    #allocation7 [shape = 'u8[16384]{0}', space=vmem, size = 0x4000, scoped, tag = 'input window, operand 2, single buffered']
    #allocation8 [shape = 'u8[4096]{0}', space=vmem, size = 0x1000, scoped, tag = 'output window, operand 0, single buffered']
    %8 = vsyncpa [#allocation3], 0
    %9 = vsyncpa [#allocation6], 0
    %10 = vsyncpa [#allocation4], 0
    // Predicated region
    $region2: #{tpu_custom_call.1} parent=1 // pred_check
      _
    $region3: #{tpu_custom_call.1} parent=1 // pred_check_branch
      %12 = sbr.rel (0) target = $region5
    $region4: #{tpu_custom_call.1} parent=1 // pred_region
      %14 = vsyncadd [#allocation3], 0
      %s16 = sshll.u32 %s0, 4
      %s17 = int_to_ptr.hbm [resolvable:$true] %s16
      %s18 = sshll.u32 [#allocation2], 4
      %s19 = int_to_ptr.vmem [resolvable:$true] %s18
      %21 = dma.hbm_to_vmem [thread:$0]  %s17, 128, %s19, [#allocation3]
    $region5: #{tpu_custom_call.1} parent=1 // pred_fallthru
      _
    // Predicated region
    $region6: #{tpu_custom_call.1} parent=1 // pred_check
      _
    $region7: #{tpu_custom_call.1} parent=1 // pred_check_branch
      %23 = sbr.rel (0) target = $region9
    $region8: #{tpu_custom_call.1} parent=1 // pred_region
      %25 = vsyncadd [#allocation6], 0
      %s26 = sshll.u32 %s1, 4
      %s27 = int_to_ptr.hbm [resolvable:$true] %s26
      %s28 = sshll.u32 [#allocation5], 4
      %s29 = int_to_ptr.vmem [resolvable:$true] %s28
      %34 = dma.hbm_to_vmem [thread:$0]  %s27, 512, %s29, [#allocation6], 128, 128, 8
    $region9: #{tpu_custom_call.1} parent=1 // pred_fallthru
      _
    // Predicated region
    $region10: #{tpu_custom_call.1} parent=1 // pred_check
      _
    $region11: #{tpu_custom_call.1} parent=1 // pred_check_branch
      %36 = sbr.rel (0) target = $region13
    $region12: #{tpu_custom_call.1} parent=1 // pred_region
      %38 = vsyncadd [#allocation6], 0
      %s39 = sshll.u32 %s2, 4
      %s40 = int_to_ptr.hbm [resolvable:$true] %s39
      %s41 = sshll.u32 [#allocation7], 4
      %s42 = int_to_ptr.vmem [resolvable:$true] %s41
      %47 = dma.hbm_to_vmem [thread:$0]  %s40, 512, %s42, [#allocation6], 128, 128, 8
    $region13: #{tpu_custom_call.1} parent=1 // pred_fallthru
      _
    // Predicated region
    $region14: #{tpu_custom_call.1} parent=1 // pred_check
      _
    $region15: #{tpu_custom_call.1} parent=1 // pred_check_branch
      %49 = sbr.rel (0) target = $region17
    $region16: #{tpu_custom_call.1} parent=1 // pred_region
      %51 = dma.done [#allocation3], 128
    $region17: #{tpu_custom_call.1} parent=1 // pred_fallthru
      _
    // Predicated region
    $region18: #{tpu_custom_call.1} parent=1 // pred_check
      _
    $region19: #{tpu_custom_call.1} parent=1 // pred_check_branch
      %53 = sbr.rel (0) target = $region21
    $region20: #{tpu_custom_call.1} parent=1 // pred_region
      %55 = dma.done [#allocation6], 512
    $region21: #{tpu_custom_call.1} parent=1 // pred_fallthru
      _
    // Predicated region
    $region22: #{tpu_custom_call.1} parent=1 // pred_check
      _
    $region23: #{tpu_custom_call.1} parent=1 // pred_check_branch
      %57 = sbr.rel (0) target = $region25
    $region24: #{tpu_custom_call.1} parent=1 // pred_region
      %59 = dma.done [#allocation6], 512
    $region25: #{tpu_custom_call.1} parent=1 // pred_fallthru
      _
    %v60 = vld [vmem:[#allocation2] sm:$0xff]
    %v61 = vld [vmem:[#allocation5] sm:$0xff]
    %v62 = vld [vmem:[#allocation5 + $0x8] sm:$0xff]
    %v63 = vld [vmem:[#allocation5 + $0x10] sm:$0xff]
    %v64 = vld [vmem:[#allocation5 + $0x18] sm:$0xff]
    %v65 = vld [vmem:[#allocation7] sm:$0xff]
    %v66 = vld [vmem:[#allocation7 + $0x8] sm:$0xff]
    %v67 = vld [vmem:[#allocation7 + $0x10] sm:$0xff]
    %v68 = vld [vmem:[#allocation7 + $0x18] sm:$0xff]
    %vm69 = vcmask 261120
    %v71 = vsel %vm69, %v60, 0
    %73 = vmatpush.msra.mxu0 0.0
    %74 = vmatpush.msra.mxu0 0.0
    %75 = vmatpush.msra.mxu0 0.0
    %76 = vmatpush.msra.mxu0 0.0
    %77 = vmatpush.msra.mxu0 0.0
    %78 = vmatpush.msra.mxu0 0.0
    %79 = vmatpush.msra.mxu0 0.0
    %80 = vmatpush.msra.mxu0 0.0
    %81 = vmatpush.msra.mxu0 0.0
    %82 = vmatpush.msra.mxu0 0.0
    %83 = vmatpush.msra.mxu0 0.0
    %84 = vmatpush.msra.mxu0 0.0
    %85 = vmatpush.msra.mxu0 %v64
    %86 = vmatpush.msra.mxu0 %v63
    %87 = vmatpush.msra.mxu0 %v62
    %88 = vmatpush.msra.mxu0 %v61
    %89 = vmatmul.f32.gmra.mxu0 %v71
    %v90 = vpop.f32.mrf.mxu0
    %v91 = vadd.f32 0.0, %v90
    %92 = vdwg.mxu0
    %v94 = vsel %vm69, %v91, 0
    %96 = vmatpush.msra.mxu0 0.0
    %97 = vmatpush.msra.mxu0 0.0
    %98 = vmatpush.msra.mxu0 0.0
    %99 = vmatpush.msra.mxu0 0.0
    %100 = vmatpush.msra.mxu0 0.0
    %101 = vmatpush.msra.mxu0 0.0
    %102 = vmatpush.msra.mxu0 0.0
    %103 = vmatpush.msra.mxu0 0.0
    %104 = vmatpush.msra.mxu0 0.0
    %105 = vmatpush.msra.mxu0 0.0
    %106 = vmatpush.msra.mxu0 0.0
    %107 = vmatpush.msra.mxu0 0.0
    %108 = vmatpush.msra.mxu0 %v68
    %109 = vmatpush.msra.mxu0 %v67
    %110 = vmatpush.msra.mxu0 %v66
    %111 = vmatpush.msra.mxu0 %v65
    %112 = vmatmul.f32.gmra.mxu0 %v94
    %v113 = vpop.f32.mrf.mxu0
    %v114 = vadd.f32 0.0, %v113
    %115 = vdwg.mxu0
    %v116 = vlaneseq
    %v117 = vand.u32 %v116, 127
    %vm118 = vcmp.lt.s32.totalorder %v117, 8
    %v119 = vsel %vm118, %v114, -inf
    %120 = vmax.xlane.f32.xlu0 %v119
    %v121 = vpop.xlane.xlu0 %120
    %v122 = vsub.f32 %v119, %v121
    %v123 = vmul.f32 %v122, 1.442695
    %v124 = vpow.pop %v123
    %125 = vadd.xlane.f32.xlu0 %v124
    %v126 = vpop.xlane.xlu0 %125
    %v127 = vrcp.pop %v126
    %v128 = vmul.f32 %v126, %v127
    %v129 = vsub.f32 1.0, %v128
    %v130 = vmul.f32 %v127, %v129
    %v131 = vadd.f32 %v127, %v130
    %vm132 = vweird.f32 %v126
    %vm133 = vweird.f32 %v127
    %vm134 = vmor %vm132, %vm133
    %v135 = vsel %vm134, %v127, %v131
    %v136 = vand.u32 2147483647, %v126
    %vm137 = vcmp.eq.f32.partialorder %v136, 8.507059e+37
    %v138 = vand.u32 %v126, 2147483648
    %v139 = vor.u32 1.1754944e-38, %v138
    %v140 = vsel %vm137, %v139, %v135
    %v141 = vmul.f32 %v124, %v140
    %142 = vst [vmem:[#allocation8] sm:$0xff] %v141
    // Predicated region
    $region26: #{tpu_custom_call.1} parent=1 // pred_check
      _
    $region27: #{tpu_custom_call.1} parent=1 // pred_check_branch
      %144 = sbr.rel (0) target = $region29
    $region28: #{tpu_custom_call.1} parent=1 // pred_region
      %146 = vsyncadd [#allocation4], 0
      %s148 = sshll.u32 [#allocation8], 4
      %s149 = int_to_ptr.vmem [resolvable:$true] %s148
      %s150 = sshll.u32 %s3, 4
      %s151 = int_to_ptr.hbm [resolvable:$true] %s150
      %153 = dma.vmem_to_hbm [thread:$0]  %s149, 128, %s151, [#allocation4]
    $region29: #{tpu_custom_call.1} parent=1 // pred_fallthru
      _
    // Predicated region
    $region30: #{tpu_custom_call.1} parent=1 // pred_check
      _
    $region31: #{tpu_custom_call.1} parent=1 // pred_check_branch
      %155 = sbr.rel (0) target = $region33
    $region32: #{tpu_custom_call.1} parent=1 // pred_region
      %157 = dma.done [#allocation4], 128
    $region33: #{tpu_custom_call.1} parent=1 // pred_fallthru
      _
    %158 = vsyncpa [#allocation3], 1
    %159 = vsyncpa [#allocation6], 1
    %160 = vsyncpa [#allocation4], 1

</llo_original>
